<compile_context>
chip_gen: v7x
topology: tpu7x:2x2x1
jax: 0.10.0
libtpu: 0.0.40
codegen_flags: <defaults>
</compile_context>

<pallas_src>
import jax
import jax.numpy as jnp
from jax.experimental import pallas as pl
from jax.experimental.pallas import tpu as pltpu

_LANES = 128


def _weighted_act_kernel(p_ref, x_ref, o_ref):
    # p_ref lives in SMEM: [pos_coef = a + b, neg_coef = 0.01 * b, c]
    pos = p_ref[0]
    neg = p_ref[1]
    c = p_ref[2]
    x = x_ref[...].astype(jnp.float32)
    y = jnp.where(x >= 0.0, pos * x, neg * x) + c * jnp.tanh(x)
    o_ref[...] = y.astype(o_ref.dtype)


def _default_block_bytes():
    """Pick block size per TPU generation (vs. scoped-VMEM default & HBM BW)."""
    try:
        kind = jax.devices()[0].device_kind.lower()
    except Exception:
        kind = ""
    if "v7" in kind:
        return 4 << 20   # 3.2 TB/s/TC: amortize ~0.35us/step; 4x4MiB fits 32MiB scoped
    if "v6" in kind:
        return 4 << 20   # ~1.4 TB/s: 4 MiB blocks ~90%+ of roofline
    return 2 << 20       # v5e/older: 16 MiB default scoped VMEM -> 2 MiB is safe


def weighted_activations(x, a, b, c, *, target_block_bytes=None):
    """out = a*relu(x) + b*leaky_relu(x, 0.01) + c*tanh(x), elementwise.

    x: any-shape float array (f32 / bf16 / f16). a, b, c: scalars.
    """
    if target_block_bytes is None:
        target_block_bytes = _default_block_bytes()

    orig_shape = x.shape
    dtype = x.dtype
    itemsize = jnp.dtype(dtype).itemsize
    sub = max(8, 32 // max(itemsize, 1))     # sublanes: 8 (f32), 16 (bf16/f16)

    flat = x.reshape(-1)                     # native dtype, no upcast copy
    n = flat.shape[0]

    # Only the lane dim (128) must divide the array; the (sub,128) divisibility
    # lives on the block_shape. Pad is <= 127 elems and usually skipped.
    padded = pl.cdiv(n, _LANES) * _LANES
    if padded != n:
        # TODO(synk): the pad + trailing slice add extra HBM passes; a masked
        # final block via a scalar-prefetched length would remove them.
        flat = jnp.pad(flat, (0, padded - n))
    rows = padded // _LANES
    x2d = flat.reshape(rows, _LANES)

    # Target tile (multiple of the sublane count), clamped for tiny inputs.
    tile_rows = max(sub, (target_block_bytes // (_LANES * itemsize)) // sub * sub)
    # Keep >= ~4 grid steps when the input is large enough: preserves megacore
    # sharding on v7x and leaves steps for the double-buffer pipeline.
    min_steps = 4
    step_cap = max(sub, pl.cdiv(pl.cdiv(rows, min_steps), sub) * sub)
    tile_rows = min(tile_rows, step_cap, rows)

    block_bytes = tile_rows * _LANES * itemsize
    # Double-buffered input + output = 4x block bytes; request generous headroom
    # (32 MiB is within physical VMEM on v5e/v6e/v7x).
    vmem_limit = int(min(max(6 * block_bytes, 16 << 20), 32 << 20))

    # Fold scalars once: relu + positive leaky branch -> (a+b)*x,
    # negative leaky branch -> 0.01*b*x (leaky_relu default slope).
    a = jnp.asarray(a, jnp.float32).reshape(())
    b = jnp.asarray(b, jnp.float32).reshape(())
    c = jnp.asarray(c, jnp.float32).reshape(())
    params = jnp.stack([a + b, 0.01 * b, c])

    grid = (pl.cdiv(rows, tile_rows),)
    cost = pl.CostEstimate(
        flops=5 * padded,
        transcendentals=padded,
        bytes_accessed=2 * padded * itemsize,
    )

    out2d = pl.pallas_call(
        _weighted_act_kernel,
        out_shape=jax.ShapeDtypeStruct((rows, _LANES), dtype),
        grid=grid,
        in_specs=[
            pl.BlockSpec(memory_space=pltpu.MemorySpace.SMEM),      # params [3]
            pl.BlockSpec((tile_rows, _LANES), lambda i: (i, 0)),    # x tile
        ],
        out_specs=pl.BlockSpec((tile_rows, _LANES), lambda i: (i, 0)),
        compiler_params=pltpu.CompilerParams(
            dimension_semantics=("parallel",),
            vmem_limit_bytes=vmem_limit,
        ),
        cost_estimate=cost,
    )(params, x2d)

    out = out2d.reshape(-1)
    if padded != n:
        out = out[:n]
    return out.reshape(orig_shape)


def _reference(x, a, b, c):
    xf = x.astype(jnp.float32)
    ref = (a * jnp.maximum(xf, 0.0)
           + b * jnp.where(xf >= 0.0, xf, 0.01 * xf)
           + c * jnp.tanh(xf))
    return ref.astype(x.dtype)


if __name__ == "__main__":
    key = jax.random.PRNGKey(0)
    kx, ka, kb, kc = jax.random.split(key, 4)

    # deterministic "parameters" (analogue of torch.randn(1) in __init__)
    a = jax.random.normal(ka, ()).astype(jnp.float32)
    b = jax.random.normal(kb, ()).astype(jnp.float32)
    c = jax.random.normal(kc, ()).astype(jnp.float32)

    # small NCHW input (batch=2, channels=4, 16x16 spatial)
    x = jax.random.normal(kx, (2, 4, 16, 16), dtype=jnp.float32)

    out = jax.block_until_ready(weighted_activations(x, a, b, c))
    ref = _reference(x, a, b, c)
    assert out.shape == x.shape
    assert out.dtype == x.dtype
    assert jnp.allclose(out, ref, atol=1e-5, rtol=1e-5)

    # native bf16 I/O path (halved HBM traffic, f32 compute in-kernel)
    xb = x.astype(jnp.bfloat16)
    out_b = jax.block_until_ready(weighted_activations(xb, a, b, c))
    ref_b = _reference(xb, a, b, c)
    assert out_b.dtype == jnp.bfloat16
    assert jnp.allclose(out_b.astype(jnp.float32), ref_b.astype(jnp.float32),
                        atol=2e-2, rtol=2e-2)

    # unaligned-size path (105 elements -> single 128-lane padded row)
    xu = jax.random.normal(kx, (3, 5, 7), dtype=jnp.float32)
    out_u = jax.block_until_ready(weighted_activations(xu, a, b, c))
    assert out_u.shape == xu.shape
    assert jnp.allclose(out_u, _reference(xu, a, b, c), atol=1e-5, rtol=1e-5)

    print("KERNEL_OK")
</pallas_src>

<mosaic_0001>
module attributes {stable_mosaic.version = 11 : i64} {
  func.func @_weighted_act_kernel(%arg0: i32, %arg1: memref<3xf32, #tpu.memory_space<smem>>, %arg2: memref<8x128xf32, #tpu.memory_space<vmem>>, %arg3: memref<8x128xf32, #tpu.memory_space<vmem>>) attributes {dimension_semantics = [#tpu.dimension_semantics<parallel>], iteration_bounds = array<i64: 2>, scalar_prefetch = 0 : i64, scratch_operands = 0 : i64, tpu.core_type = #tpu.core_type<tc>, window_params = [{transform_indices = @transform_0, window_bounds = array<i64: 3>}, {transform_indices = @transform_1, window_bounds = array<i64: 8, 128>}, {transform_indices = @transform_2, window_bounds = array<i64: 8, 128>}]} {
    %c0 = arith.constant 0 : index
    %0 = memref.load %arg1[%c0] : memref<3xf32, #tpu.memory_space<smem>>
    %c1 = arith.constant 1 : index
    %1 = memref.load %arg1[%c1] : memref<3xf32, #tpu.memory_space<smem>>
    %c2 = arith.constant 2 : index
    %2 = memref.load %arg1[%c2] : memref<3xf32, #tpu.memory_space<smem>>
    %c0_0 = arith.constant 0 : index
    %c0_1 = arith.constant 0 : index
    %3 = vector.load %arg2[%c0_0, %c0_1] : memref<8x128xf32, #tpu.memory_space<vmem>>, vector<8x128xf32>
    %cst = arith.constant 0.000000e+00 : f32
    %4 = vector.broadcast %cst : f32 to vector<8x128xf32>
    %5 = arith.cmpf oge, %3, %4 : vector<8x128xf32>
    %6 = vector.broadcast %0 : f32 to vector<8x128xf32>
    %7 = arith.mulf %6, %3 : vector<8x128xf32>
    %8 = vector.broadcast %1 : f32 to vector<8x128xf32>
    %9 = arith.mulf %8, %3 : vector<8x128xf32>
    %10 = arith.select %5, %7, %9 : vector<8x128xi1>, vector<8x128xf32>
    %11 = math.tanh %3 : vector<8x128xf32>
    %12 = vector.broadcast %2 : f32 to vector<8x128xf32>
    %13 = arith.mulf %12, %11 : vector<8x128xf32>
    %14 = arith.addf %10, %13 : vector<8x128xf32>
    %c0_2 = arith.constant 0 : index
    %c0_3 = arith.constant 0 : index
    %15 = vector.load %arg3[%c0_2, %c0_3] : memref<8x128xf32, #tpu.memory_space<vmem>>, vector<8x128xf32>
    tpu.vector_store %arg3[%c0_2, %c0_3], %14 {strides = array<i32>} : memref<8x128xf32, #tpu.memory_space<vmem>>, vector<8x128xf32>,
    return
  }
  func.func @transform_0(%arg0: i32) -> i32 {
    %c0_i32 = arith.constant 0 : i32
    %c0_i32_0 = arith.constant 0 : i32
    return %c0_i32 : i32
  }
  func.func @transform_1(%arg0: i32) -> (i32, i32) {
    %c0_i32 = arith.constant 0 : i32
    %c0_i32_0 = arith.constant 0 : i32
    return %arg0, %c0_i32 : i32, i32
  }
  func.func @transform_2(%arg0: i32) -> (i32, i32) {
    %c0_i32 = arith.constant 0 : i32
    %c0_i32_0 = arith.constant 0 : i32
    return %arg0, %c0_i32 : i32, i32
  }
}

</mosaic_0001>

<llo_original>
// kernel: tpu_custom_call.1
$region0: #{tpu_custom_call.1}
  #allocation0 [shape = 'u32[]', space=smem, size = 0x4, offset = 0x4, fixed_abs, tag = 'smem constant byte address 0x4 - core index']
  #allocation1 [shape = 'u32[144,128]{1,0:T(1,128)}', space=vmem, size = 0x12000, scoped, tag = 'internal scratch']
  %s0 = inlined_call_operand.hbm [shape: f32[3], index: 0, kind: input, shape index: {}]
  %s1 = inlined_call_operand.hbm [shape: f32[16,128], index: 1, kind: input, shape index: {}]
  %s2 = inlined_call_operand.hbm [shape: f32[16,128], index: 2, kind: output, shape index: {}]
  %s3 = sld [smem:[#allocation0]]
  $region49: #{tpu_custom_call.1} parent=0
    _
  %s5 = ssub.s32 1, %s3
  %s6 = scalar_select 0, %s5, %s3
  $region1: #{tpu_custom_call.1} parent=0
    #allocation2 [shape = 'u8[512]{0}', space=smem, size = 0x200, scoped, tag = 'input window, operand 0, single buffered']
    #allocation3 [shape = 's32[2]{0}', space=sflag, size = 0x8, scoped, tag = 'scoped memory for tpu_custom_call.1']
    #allocation4 [shape = 's32[2]{0}', space=sflag, size = 0x8, scoped, tag = 'scoped memory for tpu_custom_call.1']
    #allocation5 [shape = 's32[2]{0}', space=sflag, size = 0x8, scoped, tag = 'scoped memory for tpu_custom_call.1']
    #allocation6 [shape = 'u8[8192]{0}', space=vmem, size = 0x2000, scoped, tag = 'input window, operand 1']
    #allocation7 [shape = 'u8[8192]{0}', space=vmem, size = 0x2000, scoped, tag = 'output window, operand 0']
    %7 = vsyncpa [#allocation5], 0
    %8 = vsyncpa [#allocation3], 0
    %s9 = scalar_lea.sflag [#allocation3], 1
    %10 = vsyncpa %s9, 0
    %11 = vsyncpa [#allocation4], 0
    %s12 = scalar_lea.sflag [#allocation4], 1
    %13 = vsyncpa %s12, 0
    loop: start=0, step=1, limit=4
    $region2: #{tpu_custom_call.1} parent=1 // loop_pre_header
      _
    $region3: #{tpu_custom_call.1} parent=1 // loop_header
      %s15 = sphi 0, %s19
      %p16 = scmp.ge.s32.totalorder %s15, 4
      %s23 = sphi 0, %s23
      %s25 = sphi 0, %s23
      %s26 = sphi 0, %s25
      %s40 = sphi 0, %s26
      %s46 = sphi 0, %s48
      %s49 = sphi 0, %s46
      %s50 = sphi 0, %s49
      %s66 = sphi 0, %s50
      %s72 = sphi 0, %s74
      %s75 = sphi 0, %s72
      %s76 = sphi 0, %s75
      %s92 = sphi 0, %s76
    $region4: #{tpu_custom_call.1} parent=1 // loop_header_branch
      %18 = sbr.rel (%p16) target = $region8
    $region5: #{tpu_custom_call.1} parent=1 // loop_body
      %s20 = ssub.s32 %s15, 1
      %s21 = ssub.s32 %s15, 2
      %s22 = sadd.s32 %s15, 1
      %s24 = sadd.s32 %s23, 1
      %p27 = scmp.eq.s32.totalorder %s15, 1
      %p28 = scmp.ne.s32.totalorder %s23, %s25
      %p29 = scmp.eq.s32.totalorder %s15, 0
      %p30 = por %p28, %p29
      %p31 = scmp.ne.s32.totalorder %s23, %s25
      %p32 = scmp.eq.s32.totalorder %s20, 1
      %p33 = por %p31, %p32
      %p34 = scmp.ne.s32.totalorder %s25, %s26
      %p35 = scmp.eq.s32.totalorder %s20, 0
      %p36 = por %p34, %p35
      %p37 = scmp.ne.s32.totalorder %s25, %s26
      %p38 = scmp.eq.s32.totalorder %s21, 1
      %p39 = por %p37, %p38
      %p41 = scmp.ne.s32.totalorder %s26, %s40
      %p42 = scmp.eq.s32.totalorder %s21, 0
      %p43 = por %p41, %p42
      %s44 = ssub.s32 %s15, %s22
      %p45 = scmp.eq.s32.totalorder %s44, 0
      %s47 = sadd.s32 %s46, 1
      %s48 = scalar_select %p45, %s46, %s47
      %p51 = pneg %p45
      %p52 = scmp.eq.s32.totalorder %s15, 1
      %p53 = por %p51, %p52
      %p54 = scmp.ne.s32.totalorder %s46, %s49
      %p55 = scmp.eq.s32.totalorder %s15, 0
      %p56 = por %p54, %p55
      %p57 = scmp.ne.s32.totalorder %s46, %s49
      %p58 = scmp.eq.s32.totalorder %s20, 1
      %p59 = por %p57, %p58
      %p60 = scmp.ne.s32.totalorder %s49, %s50
      %p61 = scmp.eq.s32.totalorder %s20, 0
      %p62 = por %p60, %p61
      %p63 = scmp.ne.s32.totalorder %s49, %s50
      %p64 = scmp.eq.s32.totalorder %s21, 1
      %p65 = por %p63, %p64
      %p67 = scmp.ne.s32.totalorder %s50, %s66
      %p68 = scmp.eq.s32.totalorder %s21, 0
      %p69 = por %p67, %p68
      %s70 = ssub.s32 %s15, %s22
      %p71 = scmp.eq.s32.totalorder %s70, 0
      %s73 = sadd.s32 %s72, 1
      %s74 = scalar_select %p71, %s72, %s73
      %p77 = pneg %p71
      %p78 = scmp.eq.s32.totalorder %s15, 1
      %p79 = por %p77, %p78
      %p80 = scmp.ne.s32.totalorder %s72, %s75
      %p81 = scmp.eq.s32.totalorder %s15, 0
      %p82 = por %p80, %p81
      %p83 = scmp.ne.s32.totalorder %s72, %s75
      %p84 = scmp.eq.s32.totalorder %s20, 1
      %p85 = por %p83, %p84
      %p86 = scmp.ne.s32.totalorder %s75, %s76
      %p87 = scmp.eq.s32.totalorder %s20, 0
      %p88 = por %p86, %p87
      %p89 = scmp.ne.s32.totalorder %s75, %s76
      %p90 = scmp.eq.s32.totalorder %s21, 1
      %p91 = por %p89, %p90
      %p93 = scmp.ne.s32.totalorder %s76, %s92
      %p94 = scmp.eq.s32.totalorder %s21, 0
      %p95 = por %p93, %p94
      %p96 = scmp.le.s32.totalorder 1, %s15
      %p97 = scmp.lt.s32.totalorder %s15, 3
      %p98 = pnand %p96, %p97
      %p99 = pneg %p98
      // Predicated region
      $region9: #{tpu_custom_call.1} parent=5 // pred_check
        _
      $region10: #{tpu_custom_call.1} parent=5 // pred_check_branch
        %101 = sbr.rel (%p98) target = $region12
      $region11: #{tpu_custom_call.1} parent=5 // pred_region
        %s102 = ssub.s32 %s15, 1
        // Predicated region
        $region13: #{tpu_custom_call.1} parent=11 // pred_check
          %p103 = pneg %p36
        $region14: #{tpu_custom_call.1} parent=11 // pred_check_branch
          %105 = sbr.rel (%p103) target = $region16
        $region15: #{tpu_custom_call.1} parent=11 // pred_region
          %s107 = ssub.s32 16, 16
          %108 = vsyncadd [#allocation5], %s107
          %111 = dma.hbm_to_smem %s0, 16, [#allocation2], [#allocation5]
        $region16: #{tpu_custom_call.1} parent=11 // pred_fallthru
          _
      $region12: #{tpu_custom_call.1} parent=5 // pred_fallthru
        _
      %p112 = scmp.lt.s32.totalorder %s15, 2
      // Predicated region
      $region17: #{tpu_custom_call.1} parent=5 // pred_check
        %p113 = pneg %p112
      $region18: #{tpu_custom_call.1} parent=5 // pred_check_branch
        %115 = sbr.rel (%p113) target = $region20
      $region19: #{tpu_custom_call.1} parent=5 // pred_region
        // Predicated region
        $region21: #{tpu_custom_call.1} parent=19 // pred_check
          %p116 = pneg %p56
        $region22: #{tpu_custom_call.1} parent=19 // pred_check_branch
          %118 = sbr.rel (%p116) target = $region24
        $region23: #{tpu_custom_call.1} parent=19 // pred_region
          %s119 = sand.u32 %s46, 1
          %s120 = scalar_lea.sflag [#allocation3], %s119
          %s121 = sand.u32 %s46, 1
          %s122 = smul.addr %s121, 8
          %s123 = scalar_lea.vmem [#allocation6], %s122
          %s125 = ssub.s32 128, 128
          %126 = vsyncadd %s120, %s125
          %s127 = smul.addr %s15, 128
          %s128 = scalar_lea.hbm %s1, %s127
          %s130 = sshll.u32 %s123, 4
          %s131 = int_to_ptr.vmem [resolvable:$true] %s130
          %133 = dma.hbm_to_vmem [thread:$0]  %s128, 128, %s131, %s120
        $region24: #{tpu_custom_call.1} parent=19 // pred_fallthru
          _
      $region20: #{tpu_custom_call.1} parent=5 // pred_fallthru
        _
      %p134 = scmp.le.s32.totalorder 1, %s15
      %p135 = scmp.lt.s32.totalorder %s15, 3
      %p136 = pnand %p134, %p135
      %p137 = pneg %p136
      // Predicated region
      $region25: #{tpu_custom_call.1} parent=5 // pred_check
        _
      $region26: #{tpu_custom_call.1} parent=5 // pred_check_branch
        %139 = sbr.rel (%p136) target = $region28
      $region27: #{tpu_custom_call.1} parent=5 // pred_region
        %s140 = ssub.s32 %s15, 1
        // Predicated region
        $region29: #{tpu_custom_call.1} parent=27 // pred_check
          %p141 = pneg %p36
        $region30: #{tpu_custom_call.1} parent=27 // pred_check_branch
          %143 = sbr.rel (%p141) target = $region32
        $region31: #{tpu_custom_call.1} parent=27 // pred_region
          %144 = dma.done [#allocation5], 16
        $region32: #{tpu_custom_call.1} parent=27 // pred_fallthru
          _
        %s145 = sand.u32 %s49, 1
        %s146 = scalar_lea.sflag [#allocation3], %s145
        %s147 = sand.u32 %s49, 1
        %s148 = smul.addr %s147, 8
        %s149 = scalar_lea.vmem [#allocation6], %s148
        // Predicated region
        $region33: #{tpu_custom_call.1} parent=27 // pred_check
          %p150 = pneg %p62
        $region34: #{tpu_custom_call.1} parent=27 // pred_check_branch
          %152 = sbr.rel (%p150) target = $region36
        $region35: #{tpu_custom_call.1} parent=27 // pred_region
          %153 = dma.done %s146, 128
        $region36: #{tpu_custom_call.1} parent=27 // pred_fallthru
          _
        %154 = sfence
        %p155 = pneg %p36
        %p156 = pneg %p33
        %s157 = sand.u32 %s49, 1
        %s158 = scalar_lea.sflag [#allocation3], %s157
        %s159 = sand.u32 %s49, 1
        %s160 = smul.addr %s159, 8
        %s161 = scalar_lea.vmem [#allocation6], %s160
        %p162 = pneg %p62
        %p163 = pneg %p59
        %p164 = pneg %p88
        %p165 = pneg %p85
        %s166 = sand.u32 %s75, 1
        %s167 = scalar_lea.sflag [#allocation4], %s166
        %s168 = sand.u32 %s75, 1
        %s169 = smul.addr %s168, 8
        %s170 = scalar_lea.vmem [#allocation7], %s169
        %s171 = sld [smem:[#allocation2]]
        %s172 = sld [smem:[#allocation2 + $0x1]]
        %s173 = sld [smem:[#allocation2 + $0x2]]
        %v174 = vld [vmem:[%s149] sm:$0xff]
        %vm175 = vcmp.ge.f32.partialorder %v174, 0.0
        %v176 = vstv %s171
        %v177 = vmul.f32 %v176, %v174
        %v178 = vstv %s172
        %v179 = vmul.f32 %v178, %v174
        %v180 = vsel %vm175, %v177, %v179
        %v181 = vtanh.pop %v174
        %v182 = vstv %s173
        %v183 = vmul.f32 %v182, %v181
        %v184 = vadd.f32 %v180, %v183
        %185 = vst [vmem:[%s170] sm:$0xff] %v184
        %s186 = sand.u32 %s75, 1
        %s187 = scalar_lea.sflag [#allocation4], %s186
        %s188 = sand.u32 %s75, 1
        %s189 = smul.addr %s188, 8
        %s190 = scalar_lea.vmem [#allocation7], %s189
        // Predicated region
        $region37: #{tpu_custom_call.1} parent=27 // pred_check
          %p191 = pneg %p85
        $region38: #{tpu_custom_call.1} parent=27 // pred_check_branch
          %193 = sbr.rel (%p191) target = $region40
        $region39: #{tpu_custom_call.1} parent=27 // pred_region
          %s195 = ssub.s32 128, 128
          %196 = vsyncadd %s187, %s195
          %s197 = smul.addr %s20, 128
          %s198 = scalar_lea.hbm %s2, %s197
          %s200 = sshll.u32 %s190, 4
          %s201 = int_to_ptr.vmem [resolvable:$true] %s200
          %203 = dma.vmem_to_hbm [thread:$0]  %s201, 128, %s198, %s187
        $region40: #{tpu_custom_call.1} parent=27 // pred_fallthru
          _
      $region28: #{tpu_custom_call.1} parent=5 // pred_fallthru
        _
      %p204 = scmp.le.s32.totalorder 2, %s15
      // Predicated region
      $region41: #{tpu_custom_call.1} parent=5 // pred_check
        %p205 = pneg %p204
      $region42: #{tpu_custom_call.1} parent=5 // pred_check_branch
        %207 = sbr.rel (%p205) target = $region44
      $region43: #{tpu_custom_call.1} parent=5 // pred_region
        %s208 = ssub.s32 %s15, 2
        // Predicated region
        $region45: #{tpu_custom_call.1} parent=43 // pred_check
          %p209 = pneg %p91
        $region46: #{tpu_custom_call.1} parent=43 // pred_check_branch
          %211 = sbr.rel (%p209) target = $region48
        $region47: #{tpu_custom_call.1} parent=43 // pred_region
          %s212 = sand.u32 %s76, 1
          %s213 = scalar_lea.sflag [#allocation4], %s212
          %s214 = sand.u32 %s76, 1
          %s215 = smul.addr %s214, 8
          %s216 = scalar_lea.vmem [#allocation7], %s215
          %217 = dma.done %s213, 128
        $region48: #{tpu_custom_call.1} parent=43 // pred_fallthru
          _
      $region44: #{tpu_custom_call.1} parent=5 // pred_fallthru
        _
    $region6: #{tpu_custom_call.1} parent=1 // loop_footer
      %s19 = sadd.s32 1, %s15
    $region7: #{tpu_custom_call.1} parent=1 // loop_footer_branch
      %14 = sbr.rel target = $region3
    $region8: #{tpu_custom_call.1} parent=1 // loop_exit
      _
    %218 = vsyncpa [#allocation3], 1
    %s219 = scalar_lea.sflag [#allocation3], 1
    %220 = vsyncpa %s219, 1
    %221 = vsyncpa [#allocation4], 1
    %s222 = scalar_lea.sflag [#allocation4], 1
    %223 = vsyncpa %s222, 1
    %224 = vsyncpa [#allocation5], 1
    %s225 = scalar_lea.sflag [#allocation5], 1
    %226 = vsyncpa %s225, 1

</llo_original>
